<compile_context>
chip_gen: v7x
topology: tpu7x:2x2x1
jax: 0.10.0
libtpu: 0.0.40
codegen_flags: <defaults>
</compile_context>

<pallas_src>
import functools

import numpy as np
import jax
import jax.numpy as jnp
from jax.experimental import pallas as pl
from jax.experimental.pallas import tpu as pltpu


def _round_up(v, m):
    return ((v + m - 1) // m) * m


def _conv_bn_kernel(x_ref, w_ref, mask_ref, gamma_ref, beta_ref, o_ref,
                    sum_ref, ssq_ref, *, offs, l_pad, nb, count, eps,
                    activation):
    # Grid: (phase, batch_block).  phase 0 = statistics, phase 1 = apply.
    # x_ref:     (NB, c_pad, lx)        padded + flattened images
    # w_ref:     (c_out, kk*c_pad)      fused per-tap weight matrix
    # mask_ref:  (1, NB*l_pad)          1.0 at valid output positions
    # gamma/beta: (c_out, 1)
    # o_ref:     (NB, c_out, l_pad)     BN'd + activated conv output
    # sum_ref/ssq_ref: (c_out, 1)       VMEM accumulators (persist across steps)
    ph = pl.program_id(0)
    b = pl.program_id(1)

    @pl.when(jnp.logical_and(ph == 0, b == 0))
    def _():
        sum_ref[...] = jnp.zeros_like(sum_ref)
        ssq_ref[...] = jnp.zeros_like(ssq_ref)

    # Fused conv: stack the kh*kw shifted windows of every image in the block
    # into one (kk*c_pad, NB*l_pad) operand -> a single MXU contraction.
    # (Sublane concat is tile-aligned because c_pad % 8 == 0; lane concat is at
    #  multiples of 128 because l_pad % 128 == 0.)
    stacks = []
    for bb in range(nb):
        win = [x_ref[bb, :, off:off + l_pad] for off in offs]
        stacks.append(jnp.concatenate(win, axis=0) if len(win) > 1 else win[0])
    stacked = jnp.concatenate(stacks, axis=1) if nb > 1 else stacks[0]
    z = jnp.dot(w_ref[...], stacked, preferred_element_type=jnp.float32)

    @pl.when(ph == 0)
    def _():
        masked = z * mask_ref[...]
        sum_ref[...] += jnp.sum(masked, axis=-1, keepdims=True)
        ssq_ref[...] += jnp.sum(masked * z, axis=-1, keepdims=True)

    @pl.when(ph == 1)
    def _():
        inv_n = 1.0 / count
        mean = sum_ref[...] * inv_n
        var = ssq_ref[...] * inv_n - mean * mean     # biased, as in BN training
        inv_std = jax.lax.rsqrt(var + eps)
        scale = gamma_ref[...] * inv_std
        shift = beta_ref[...] - mean * scale
        y = z * scale + shift
        if activation is not None:
            y = activation(y)
        y = y.astype(o_ref.dtype)
        for bb in range(nb):
            o_ref[bb] = y[:, bb * l_pad:(bb + 1) * l_pad]


def conv2d_bn(x, weight, bias, gamma, beta, *, stride=1, padding=1, dilation=1,
              activation=None, eps=1e-5):
    """Forward pass of Conv2dBN (training-mode BatchNorm with batch statistics).

    x:      (N, C_in, H, W)        NCHW
    weight: (C_out, C_in, KH, KW)  nn.Conv2d.weight
    bias:   (C_out,)               nn.Conv2d.bias (cancels under training BN)
    gamma:  (C_out,)               BatchNorm2d.weight
    beta:   (C_out,)               BatchNorm2d.bias
    returns (N, C_out, H_out, W_out) NCHW
    """
    del bias  # Mathematically cancels in (conv + b) - mean(conv + b).
    n, c_in, h, w = x.shape
    c_out, c_in_w, kh, kw = weight.shape
    assert c_in == c_in_w
    s, p, d = stride, padding, dilation

    hp, wp = h + 2 * p, w + 2 * p
    ho = (hp - d * (kh - 1) - 1) // s + 1
    wo = (wp - d * (kw - 1) - 1) // s + 1
    hz = hp - d * (kh - 1)                 # number of stride-1 row starts
    lz = hz * wp                           # flat "stride-1" output length
    l_pad = _round_up(lz, 128)             # lane-dense output tile width
    max_off = d * ((kh - 1) * wp + (kw - 1))
    need = max_off + l_pad
    extra_rows = max(0, -(-(need - hp * wp) // wp))
    lx = (hp + extra_rows) * wp            # flat padded input length
    c_pad = _round_up(c_in, 8)             # sublane-aligned channel count
    kk = kh * kw

    # Single HBM pad pass: halo + channel pad + flat tail in one jnp.pad,
    # followed by a free reshape.
    x_flat = jnp.pad(x.astype(jnp.float32),
                     ((0, 0), (0, c_pad - c_in),
                      (p, p + extra_rows), (p, p))).reshape(n, c_pad, lx)

    # Fused weight matrix: w_mat[co, (i*kw + j)*c_pad + ci] == weight[co, ci, i, j]
    w_p = jnp.pad(weight.astype(jnp.float32),
                  ((0, 0), (0, c_pad - c_in), (0, 0), (0, 0)))
    w_mat = jnp.transpose(w_p, (0, 2, 3, 1)).reshape(c_out, kk * c_pad)

    g2 = gamma.astype(jnp.float32).reshape(c_out, 1)
    be2 = beta.astype(jnp.float32).reshape(c_out, 1)

    # Validity mask over the flat stride-1 grid (garbage wrap columns / tail,
    # non-strided positions) — only used for the BN statistics.
    q = np.arange(l_pad)
    a_idx, b_idx = q // wp, q % wp
    valid = ((q < lz)
             & (a_idx % s == 0) & (a_idx // s < ho)
             & (b_idx % s == 0) & (b_idx // s < wo)).astype(np.float32)

    # VMEM-budget-aware sizing (64 MiB on v7x vs 128 MiB on v5e/v6e).
    try:
        vmem_cap = int(pltpu.get_tpu_info().vmem_capacity_bytes)
    except Exception:
        vmem_cap = 128 * 1024 * 1024
    vmem_limit = max(32 * 1024 * 1024, min(vmem_cap // 2, 64 * 1024 * 1024))

    # Pick the number of images per grid step (largest divisor of n that fits).
    per_img = 4 * (c_pad * lx + 2 * c_out * l_pad + kk * c_pad * l_pad)
    budget = vmem_limit // 4
    nb = 1
    for cand in range(1, n + 1):
        if n % cand == 0 and cand * per_img <= budget:
            nb = cand
    n_blocks = n // nb

    mask_big = jnp.asarray(np.tile(valid, nb).reshape(1, nb * l_pad),
                           dtype=jnp.float32)
    offs = tuple(d * (i * wp + j) for i in range(kh) for j in range(kw))
    count = float(n * ho * wo)

    kernel = functools.partial(_conv_bn_kernel, offs=offs, l_pad=l_pad, nb=nb,
                               count=count, eps=eps, activation=activation)

    out_flat = pl.pallas_call(
        kernel,
        out_shape=jax.ShapeDtypeStruct((n, c_out, l_pad), x.dtype),
        grid=(2, n_blocks),
        in_specs=[
            pl.BlockSpec((nb, c_pad, lx), lambda ph, b: (b, 0, 0)),
            pl.BlockSpec((c_out, kk * c_pad), lambda ph, b: (0, 0)),
            pl.BlockSpec((1, nb * l_pad), lambda ph, b: (0, 0)),
            pl.BlockSpec((c_out, 1), lambda ph, b: (0, 0)),
            pl.BlockSpec((c_out, 1), lambda ph, b: (0, 0)),
        ],
        # Phase 0 pins the output block index at 0 (no garbage write-backs);
        # phase 1 writes block b.
        out_specs=pl.BlockSpec((nb, c_out, l_pad), lambda ph, b: (b * ph, 0, 0)),
        scratch_shapes=[pltpu.VMEM((c_out, 1), jnp.float32),
                        pltpu.VMEM((c_out, 1), jnp.float32)],
        compiler_params=pltpu.CompilerParams(
            dimension_semantics=("arbitrary", "arbitrary"),
            vmem_limit_bytes=vmem_limit),
    )(x_flat, w_mat, mask_big, g2, be2)

    # Slice the valid positions; layout is already channel-major -> NCHW.
    z4 = out_flat[:, :, :lz].reshape(n, c_out, hz, wp)
    y = z4[:, :, ::s, ::s][:, :, :ho, :wo]
    return y


if __name__ == "__main__":
    # Conv2dBN(input_channels=4, output_channels=8, kernel_size=3,
    #          stride=1, padding=1, dilation=1, activation=None / relu)
    N, C_IN, H, W = 2, 4, 16, 16
    C_OUT, K = 8, 3

    key = jax.random.PRNGKey(0)
    kx, kw_, kb = jax.random.split(key, 3)

    x = jax.random.normal(kx, (N, C_IN, H, W), dtype=jnp.float32)

    fan_in = C_IN * K * K
    bound = 1.0 / float(np.sqrt(fan_in))
    weight = jax.random.uniform(kw_, (C_OUT, C_IN, K, K),
                                minval=-bound, maxval=bound, dtype=jnp.float32)
    bias = jax.random.uniform(kb, (C_OUT,), minval=-bound, maxval=bound,
                              dtype=jnp.float32)
    gamma = jnp.ones((C_OUT,), jnp.float32)   # BatchNorm2d.weight init
    beta = jnp.zeros((C_OUT,), jnp.float32)   # BatchNorm2d.bias init

    def reference(x, weight, bias, gamma, beta, activation):
        hconv = jax.lax.conv_general_dilated(
            x, weight, window_strides=(1, 1), padding=((1, 1), (1, 1)),
            rhs_dilation=(1, 1), dimension_numbers=("NCHW", "OIHW", "NCHW"))
        hconv = hconv + bias[None, :, None, None]
        mean = jnp.mean(hconv, axis=(0, 2, 3), keepdims=True)
        var = jnp.var(hconv, axis=(0, 2, 3), keepdims=True)   # biased, as in BN
        out = (hconv - mean) * jax.lax.rsqrt(var + 1e-5)
        out = out * gamma[None, :, None, None] + beta[None, :, None, None]
        return activation(out) if activation is not None else out

    for act in (None, jax.nn.relu):
        out = conv2d_bn(x, weight, bias, gamma, beta, stride=1, padding=1,
                        dilation=1, activation=act)
        out = jax.block_until_ready(out)
        ref = reference(x, weight, bias, gamma, beta, act)
        assert out.shape == (N, C_OUT, H, W), out.shape
        assert jnp.allclose(out, ref, atol=1e-3, rtol=1e-3), \
            float(jnp.max(jnp.abs(out - ref)))

    print("KERNEL_OK")
</pallas_src>

<mosaic_0001>
module attributes {stable_mosaic.version = 11 : i64} {
  func.func @_conv_bn_kernel(%arg0: i32, %arg1: i32, %arg2: memref<2x8x432xf32, #tpu.memory_space<vmem>>, %arg3: memref<8x72xf32, #tpu.memory_space<vmem>>, %arg4: memref<1x768xf32, #tpu.memory_space<vmem>>, %arg5: memref<8x1xf32, #tpu.memory_space<vmem>>, %arg6: memref<8x1xf32, #tpu.memory_space<vmem>>, %arg7: memref<2x8x384xf32, #tpu.memory_space<vmem>>, %arg8: memref<8x1xf32, #tpu.memory_space<vmem>>, %arg9: memref<8x1xf32, #tpu.memory_space<vmem>>) attributes {dimension_semantics = [#tpu.dimension_semantics<arbitrary>, #tpu.dimension_semantics<arbitrary>], iteration_bounds = array<i64: 2, 1>, scalar_prefetch = 0 : i64, scratch_operands = 2 : i64, tpu.core_type = #tpu.core_type<tc>, window_params = [{transform_indices = @transform_0, window_bounds = array<i64: 2, 8, 432>}, {pipeline_mode = #tpu.pipeline_mode<synchronous>, transform_indices = @transform_1, window_bounds = array<i64: 8, 72>}, {pipeline_mode = #tpu.pipeline_mode<synchronous>, transform_indices = @transform_2, window_bounds = array<i64: 1, 768>}, {pipeline_mode = #tpu.pipeline_mode<synchronous>, transform_indices = @transform_3, window_bounds = array<i64: 8, 1>}, {pipeline_mode = #tpu.pipeline_mode<synchronous>, transform_indices = @transform_4, window_bounds = array<i64: 8, 1>}, {transform_indices = @transform_5, window_bounds = array<i64: 2, 8, 384>}]} {
    %c0_i32 = arith.constant 0 : i32
    %0 = arith.cmpi eq, %arg0, %c0_i32 : i32
    %c0_i32_0 = arith.constant 0 : i32
    %1 = arith.cmpi eq, %arg1, %c0_i32_0 : i32
    %2 = arith.andi %0, %1 : i1
    %3 = arith.extui %2 : i1 to i32
    %c0_i32_1 = arith.constant 0 : i32
    %4 = arith.cmpi ne, %3, %c0_i32_1 : i32
    scf.if %4 {
      %cst_52 = arith.constant 0.000000e+00 : f32
      %52 = vector.broadcast %cst_52 : f32 to vector<8x1xf32>
      %c0_53 = arith.constant 0 : index
      %c0_54 = arith.constant 0 : index
      %53 = vector.load %arg8[%c0_53, %c0_54] : memref<8x1xf32, #tpu.memory_space<vmem>>, vector<8x1xf32>
      tpu.vector_store %arg8[%c0_53, %c0_54], %52 {strides = array<i32>} : memref<8x1xf32, #tpu.memory_space<vmem>>, vector<8x1xf32>,
      %cst_55 = arith.constant 0.000000e+00 : f32
      %54 = vector.broadcast %cst_55 : f32 to vector<8x1xf32>
      %c0_56 = arith.constant 0 : index
      %c0_57 = arith.constant 0 : index
      %55 = vector.load %arg9[%c0_56, %c0_57] : memref<8x1xf32, #tpu.memory_space<vmem>>, vector<8x1xf32>
      tpu.vector_store %arg9[%c0_56, %c0_57], %54 {strides = array<i32>} : memref<8x1xf32, #tpu.memory_space<vmem>>, vector<8x1xf32>,
    } else {
    }
    %c0 = arith.constant 0 : index
    %c0_2 = arith.constant 0 : index
    %c0_3 = arith.constant 0 : index
    %5 = vector.load %arg2[%c0, %c0_2, %c0_3] : memref<2x8x432xf32, #tpu.memory_space<vmem>>, vector<1x8x384xf32>
    %6 = vector.shape_cast %5 : vector<1x8x384xf32> to vector<8x384xf32>
    %c0_4 = arith.constant 0 : index
    %c0_5 = arith.constant 0 : index
    %c1 = arith.constant 1 : index
    %7 = vector.load %arg2[%c0_4, %c0_5, %c1] : memref<2x8x432xf32, #tpu.memory_space<vmem>>, vector<1x8x384xf32>
    %8 = vector.shape_cast %7 : vector<1x8x384xf32> to vector<8x384xf32>
    %c0_6 = arith.constant 0 : index
    %c0_7 = arith.constant 0 : index
    %c2 = arith.constant 2 : index
    %9 = vector.load %arg2[%c0_6, %c0_7, %c2] : memref<2x8x432xf32, #tpu.memory_space<vmem>>, vector<1x8x384xf32>
    %10 = vector.shape_cast %9 : vector<1x8x384xf32> to vector<8x384xf32>
    %c0_8 = arith.constant 0 : index
    %c0_9 = arith.constant 0 : index
    %c18 = arith.constant 18 : index
    %11 = vector.load %arg2[%c0_8, %c0_9, %c18] : memref<2x8x432xf32, #tpu.memory_space<vmem>>, vector<1x8x384xf32>
    %12 = vector.shape_cast %11 : vector<1x8x384xf32> to vector<8x384xf32>
    %c0_10 = arith.constant 0 : index
    %c0_11 = arith.constant 0 : index
    %c19 = arith.constant 19 : index
    %13 = vector.load %arg2[%c0_10, %c0_11, %c19] : memref<2x8x432xf32, #tpu.memory_space<vmem>>, vector<1x8x384xf32>
    %14 = vector.shape_cast %13 : vector<1x8x384xf32> to vector<8x384xf32>
    %c0_12 = arith.constant 0 : index
    %c0_13 = arith.constant 0 : index
    %c20 = arith.constant 20 : index
    %15 = vector.load %arg2[%c0_12, %c0_13, %c20] : memref<2x8x432xf32, #tpu.memory_space<vmem>>, vector<1x8x384xf32>
    %16 = vector.shape_cast %15 : vector<1x8x384xf32> to vector<8x384xf32>
    %c0_14 = arith.constant 0 : index
    %c0_15 = arith.constant 0 : index
    %c36 = arith.constant 36 : index
    %17 = vector.load %arg2[%c0_14, %c0_15, %c36] : memref<2x8x432xf32, #tpu.memory_space<vmem>>, vector<1x8x384xf32>
    %18 = vector.shape_cast %17 : vector<1x8x384xf32> to vector<8x384xf32>
    %c0_16 = arith.constant 0 : index
    %c0_17 = arith.constant 0 : index
    %c37 = arith.constant 37 : index
    %19 = vector.load %arg2[%c0_16, %c0_17, %c37] : memref<2x8x432xf32, #tpu.memory_space<vmem>>, vector<1x8x384xf32>
    %20 = vector.shape_cast %19 : vector<1x8x384xf32> to vector<8x384xf32>
    %c0_18 = arith.constant 0 : index
    %c0_19 = arith.constant 0 : index
    %c38 = arith.constant 38 : index
    %21 = vector.load %arg2[%c0_18, %c0_19, %c38] : memref<2x8x432xf32, #tpu.memory_space<vmem>>, vector<1x8x384xf32>
    %22 = vector.shape_cast %21 : vector<1x8x384xf32> to vector<8x384xf32>
    %23 = tpu.concatenate %6, %8, %10, %12, %14, %16, %18, %20, %22 in 0 : vector<8x384xf32>, vector<8x384xf32>, vector<8x384xf32>, vector<8x384xf32>, vector<8x384xf32>, vector<8x384xf32>, vector<8x384xf32>, vector<8x384xf32>, vector<8x384xf32> -> vector<72x384xf32>
    %c1_20 = arith.constant 1 : index
    %c0_21 = arith.constant 0 : index
    %c0_22 = arith.constant 0 : index
    %24 = vector.load %arg2[%c1_20, %c0_21, %c0_22] : memref<2x8x432xf32, #tpu.memory_space<vmem>>, vector<1x8x384xf32>
    %25 = vector.shape_cast %24 : vector<1x8x384xf32> to vector<8x384xf32>
    %c1_23 = arith.constant 1 : index
    %c0_24 = arith.constant 0 : index
    %c1_25 = arith.constant 1 : index
    %26 = vector.load %arg2[%c1_23, %c0_24, %c1_25] : memref<2x8x432xf32, #tpu.memory_space<vmem>>, vector<1x8x384xf32>
    %27 = vector.shape_cast %26 : vector<1x8x384xf32> to vector<8x384xf32>
    %c1_26 = arith.constant 1 : index
    %c0_27 = arith.constant 0 : index
    %c2_28 = arith.constant 2 : index
    %28 = vector.load %arg2[%c1_26, %c0_27, %c2_28] : memref<2x8x432xf32, #tpu.memory_space<vmem>>, vector<1x8x384xf32>
    %29 = vector.shape_cast %28 : vector<1x8x384xf32> to vector<8x384xf32>
    %c1_29 = arith.constant 1 : index
    %c0_30 = arith.constant 0 : index
    %c18_31 = arith.constant 18 : index
    %30 = vector.load %arg2[%c1_29, %c0_30, %c18_31] : memref<2x8x432xf32, #tpu.memory_space<vmem>>, vector<1x8x384xf32>
    %31 = vector.shape_cast %30 : vector<1x8x384xf32> to vector<8x384xf32>
    %c1_32 = arith.constant 1 : index
    %c0_33 = arith.constant 0 : index
    %c19_34 = arith.constant 19 : index
    %32 = vector.load %arg2[%c1_32, %c0_33, %c19_34] : memref<2x8x432xf32, #tpu.memory_space<vmem>>, vector<1x8x384xf32>
    %33 = vector.shape_cast %32 : vector<1x8x384xf32> to vector<8x384xf32>
    %c1_35 = arith.constant 1 : index
    %c0_36 = arith.constant 0 : index
    %c20_37 = arith.constant 20 : index
    %34 = vector.load %arg2[%c1_35, %c0_36, %c20_37] : memref<2x8x432xf32, #tpu.memory_space<vmem>>, vector<1x8x384xf32>
    %35 = vector.shape_cast %34 : vector<1x8x384xf32> to vector<8x384xf32>
    %c1_38 = arith.constant 1 : index
    %c0_39 = arith.constant 0 : index
    %c36_40 = arith.constant 36 : index
    %36 = vector.load %arg2[%c1_38, %c0_39, %c36_40] : memref<2x8x432xf32, #tpu.memory_space<vmem>>, vector<1x8x384xf32>
    %37 = vector.shape_cast %36 : vector<1x8x384xf32> to vector<8x384xf32>
    %c1_41 = arith.constant 1 : index
    %c0_42 = arith.constant 0 : index
    %c37_43 = arith.constant 37 : index
    %38 = vector.load %arg2[%c1_41, %c0_42, %c37_43] : memref<2x8x432xf32, #tpu.memory_space<vmem>>, vector<1x8x384xf32>
    %39 = vector.shape_cast %38 : vector<1x8x384xf32> to vector<8x384xf32>
    %c1_44 = arith.constant 1 : index
    %c0_45 = arith.constant 0 : index
    %c38_46 = arith.constant 38 : index
    %40 = vector.load %arg2[%c1_44, %c0_45, %c38_46] : memref<2x8x432xf32, #tpu.memory_space<vmem>>, vector<1x8x384xf32>
    %41 = vector.shape_cast %40 : vector<1x8x384xf32> to vector<8x384xf32>
    %42 = tpu.concatenate %25, %27, %29, %31, %33, %35, %37, %39, %41 in 0 : vector<8x384xf32>, vector<8x384xf32>, vector<8x384xf32>, vector<8x384xf32>, vector<8x384xf32>, vector<8x384xf32>, vector<8x384xf32>, vector<8x384xf32>, vector<8x384xf32> -> vector<72x384xf32>
    %43 = tpu.concatenate %23, %42 in 1 : vector<72x384xf32>, vector<72x384xf32> -> vector<72x768xf32>
    %c0_47 = arith.constant 0 : index
    %c0_48 = arith.constant 0 : index
    %44 = vector.load %arg3[%c0_47, %c0_48] : memref<8x72xf32, #tpu.memory_space<vmem>>, vector<8x72xf32>
    %cst = arith.constant dense<0.000000e+00> : vector<8x768xf32>
    %45 = tpu.matmul %44, %43, %cst {dimension_numbers = #tpu.dot_dimension_numbers<[1], [0], [0], [1], [0, 0, 1, 1], [], []>} : vector<8x72xf32>, vector<72x768xf32>, vector<8x768xf32> -> vector<8x768xf32>
    %c0_i32_49 = arith.constant 0 : i32
    %46 = arith.cmpi eq, %arg0, %c0_i32_49 : i32
    %47 = arith.extui %46 : i1 to i32
    %c0_i32_50 = arith.constant 0 : i32
    %48 = arith.cmpi ne, %47, %c0_i32_50 : i32
    scf.if %48 {
      %c0_52 = arith.constant 0 : index
      %c0_53 = arith.constant 0 : index
      %52 = vector.load %arg4[%c0_52, %c0_53] : memref<1x768xf32, #tpu.memory_space<vmem>>, vector<1x768xf32>
      %53 = vector.broadcast %52 : vector<1x768xf32> to vector<8x768xf32>
      %54 = arith.mulf %45, %53 : vector<8x768xf32>
      %c0_54 = arith.constant 0 : index
      %c0_55 = arith.constant 0 : index
      %55 = vector.load %arg8[%c0_54, %c0_55] : memref<8x1xf32, #tpu.memory_space<vmem>>, vector<8x1xf32>
      %cst_56 = arith.constant dense<0.000000e+00> : vector<8xf32>
      %56 = vector.multi_reduction <add>, %54, %cst_56 [1] : vector<8x768xf32> to vector<8xf32>
      %57 = vector.shape_cast %56 : vector<8xf32> to vector<8x1xf32>
      %58 = arith.addf %55, %57 : vector<8x1xf32>
      %c0_57 = arith.constant 0 : index
      %c0_58 = arith.constant 0 : index
      %59 = vector.load %arg8[%c0_57, %c0_58] : memref<8x1xf32, #tpu.memory_space<vmem>>, vector<8x1xf32>
      tpu.vector_store %arg8[%c0_57, %c0_58], %58 {strides = array<i32>} : memref<8x1xf32, #tpu.memory_space<vmem>>, vector<8x1xf32>,
      %c0_59 = arith.constant 0 : index
      %c0_60 = arith.constant 0 : index
      %60 = vector.load %arg9[%c0_59, %c0_60] : memref<8x1xf32, #tpu.memory_space<vmem>>, vector<8x1xf32>
      %61 = arith.mulf %54, %45 : vector<8x768xf32>
      %cst_61 = arith.constant dense<0.000000e+00> : vector<8xf32>
      %62 = vector.multi_reduction <add>, %61, %cst_61 [1] : vector<8x768xf32> to vector<8xf32>
      %63 = vector.shape_cast %62 : vector<8xf32> to vector<8x1xf32>
      %64 = arith.addf %60, %63 : vector<8x1xf32>
      %c0_62 = arith.constant 0 : index
      %c0_63 = arith.constant 0 : index
      %65 = vector.load %arg9[%c0_62, %c0_63] : memref<8x1xf32, #tpu.memory_space<vmem>>, vector<8x1xf32>
      tpu.vector_store %arg9[%c0_62, %c0_63], %64 {strides = array<i32>} : memref<8x1xf32, #tpu.memory_space<vmem>>, vector<8x1xf32>,
    } else {
    }
    %c1_i32 = arith.constant 1 : i32
    %49 = arith.cmpi eq, %arg0, %c1_i32 : i32
    %50 = arith.extui %49 : i1 to i32
    %c0_i32_51 = arith.constant 0 : i32
    %51 = arith.cmpi ne, %50, %c0_i32_51 : i32
    scf.if %51 {
      %c0_52 = arith.constant 0 : index
      %c0_53 = arith.constant 0 : index
      %52 = vector.load %arg8[%c0_52, %c0_53] : memref<8x1xf32, #tpu.memory_space<vmem>>, vector<8x1xf32>
      %cst_54 = arith.constant 0.001953125 : f32
      %53 = vector.broadcast %cst_54 : f32 to vector<8x1xf32>
      %54 = arith.mulf %52, %53 : vector<8x1xf32>
      %c0_55 = arith.constant 0 : index
      %c0_56 = arith.constant 0 : index
      %55 = vector.load %arg9[%c0_55, %c0_56] : memref<8x1xf32, #tpu.memory_space<vmem>>, vector<8x1xf32>
      %cst_57 = arith.constant 0.001953125 : f32
      %56 = vector.broadcast %cst_57 : f32 to vector<8x1xf32>
      %57 = arith.mulf %55, %56 : vector<8x1xf32>
      %58 = arith.mulf %54, %54 : vector<8x1xf32>
      %59 = arith.subf %57, %58 : vector<8x1xf32>
      %cst_58 = arith.constant 9.99999974E-6 : f32
      %60 = vector.broadcast %cst_58 : f32 to vector<8x1xf32>
      %61 = arith.addf %59, %60 : vector<8x1xf32>
      %62 = math.rsqrt %61 : vector<8x1xf32>
      %c0_59 = arith.constant 0 : index
      %c0_60 = arith.constant 0 : index
      %63 = vector.load %arg5[%c0_59, %c0_60] : memref<8x1xf32, #tpu.memory_space<vmem>>, vector<8x1xf32>
      %64 = arith.mulf %63, %62 : vector<8x1xf32>
      %c0_61 = arith.constant 0 : index
      %c0_62 = arith.constant 0 : index
      %65 = vector.load %arg6[%c0_61, %c0_62] : memref<8x1xf32, #tpu.memory_space<vmem>>, vector<8x1xf32>
      %66 = arith.mulf %54, %64 : vector<8x1xf32>
      %67 = arith.subf %65, %66 : vector<8x1xf32>
      %68 = vector.broadcast %64 : vector<8x1xf32> to vector<8x768xf32>
      %69 = arith.mulf %45, %68 : vector<8x768xf32>
      %70 = vector.broadcast %67 : vector<8x1xf32> to vector<8x768xf32>
      %71 = arith.addf %69, %70 : vector<8x768xf32>
      %72 = vector.extract_strided_slice %71 {offsets = [0, 0], sizes = [8, 384], strides = [1, 1]} : vector<8x768xf32> to vector<8x384xf32>
      %c0_63 = arith.constant 0 : index
      %c0_64 = arith.constant 0 : index
      %c0_65 = arith.constant 0 : index
      %73 = vector.load %arg7[%c0_63, %c0_64, %c0_65] : memref<2x8x384xf32, #tpu.memory_space<vmem>>, vector<1x8x384xf32>
      %74 = vector.shape_cast %73 : vector<1x8x384xf32> to vector<8x384xf32>
      %75 = vector.shape_cast %72 : vector<8x384xf32> to vector<1x8x384xf32>
      tpu.vector_store %arg7[%c0_63, %c0_64, %c0_65], %75 {strides = array<i32>} : memref<2x8x384xf32, #tpu.memory_space<vmem>>, vector<1x8x384xf32>,
      %76 = vector.extract_strided_slice %71 {offsets = [0, 384], sizes = [8, 384], strides = [1, 1]} : vector<8x768xf32> to vector<8x384xf32>
      %c1_66 = arith.constant 1 : index
      %c0_67 = arith.constant 0 : index
      %c0_68 = arith.constant 0 : index
      %77 = vector.load %arg7[%c1_66, %c0_67, %c0_68] : memref<2x8x384xf32, #tpu.memory_space<vmem>>, vector<1x8x384xf32>
      %78 = vector.shape_cast %77 : vector<1x8x384xf32> to vector<8x384xf32>
      %79 = vector.shape_cast %76 : vector<8x384xf32> to vector<1x8x384xf32>
      tpu.vector_store %arg7[%c1_66, %c0_67, %c0_68], %79 {strides = array<i32>} : memref<2x8x384xf32, #tpu.memory_space<vmem>>, vector<1x8x384xf32>,
    } else {
    }
    return
  }
  func.func @transform_0(%arg0: i32, %arg1: i32) -> (i32, i32, i32) {
    %c0_i32 = arith.constant 0 : i32
    %c0_i32_0 = arith.constant 0 : i32
    %c0_i32_1 = arith.constant 0 : i32
    return %arg1, %c0_i32, %c0_i32_0 : i32, i32, i32
  }
  func.func @transform_1(%arg0: i32, %arg1: i32) -> (i32, i32) {
    %c0_i32 = arith.constant 0 : i32
    %c0_i32_0 = arith.constant 0 : i32
    %c0_i32_1 = arith.constant 0 : i32
    return %c0_i32, %c0_i32_0 : i32, i32
  }
  func.func @transform_2(%arg0: i32, %arg1: i32) -> (i32, i32) {
    %c0_i32 = arith.constant 0 : i32
    %c0_i32_0 = arith.constant 0 : i32
    %c0_i32_1 = arith.constant 0 : i32
    return %c0_i32, %c0_i32_0 : i32, i32
  }
  func.func @transform_3(%arg0: i32, %arg1: i32) -> (i32, i32) {
    %c0_i32 = arith.constant 0 : i32
    %c0_i32_0 = arith.constant 0 : i32
    %c0_i32_1 = arith.constant 0 : i32
    return %c0_i32, %c0_i32_0 : i32, i32
  }
  func.func @transform_4(%arg0: i32, %arg1: i32) -> (i32, i32) {
    %c0_i32 = arith.constant 0 : i32
    %c0_i32_0 = arith.constant 0 : i32
    %c0_i32_1 = arith.constant 0 : i32
    return %c0_i32, %c0_i32_0 : i32, i32
  }
  func.func @transform_5(%arg0: i32, %arg1: i32) -> (i32, i32, i32) {
    %0 = arith.muli %arg1, %arg0 : i32
    %c0_i32 = arith.constant 0 : i32
    %c0_i32_0 = arith.constant 0 : i32
    %c0_i32_1 = arith.constant 0 : i32
    return %0, %c0_i32, %c0_i32_0 : i32, i32, i32
  }
}

</mosaic_0001>

<llo_original>
// kernel: tpu_custom_call.1
$region0: #{tpu_custom_call.1}
  #allocation0 [shape = 'u32[]', space=smem, size = 0x4, offset = 0x4, fixed_abs, tag = 'smem constant byte address 0x4 - core index']
  #allocation1 [shape = 'u32[144,128]{1,0:T(1,128)}', space=vmem, size = 0x12000, scoped, tag = 'internal scratch']
  #allocation2 [shape = 'f32[8,1]{1,0:T(8,128)}', space=vmem, size = 0x1000, scoped, tag = 'scratch operand']
  #allocation3 [shape = 'f32[8,1]{1,0:T(8,128)}', space=vmem, size = 0x1000, scoped, tag = 'scratch operand']
  %s0 = inlined_call_operand.hbm [shape: f32[2,8,432], index: 0, kind: input, shape index: {}]
  %s1 = inlined_call_operand.hbm [shape: f32[8,72], index: 1, kind: input, shape index: {}]
  %s2 = inlined_call_operand.hbm [shape: f32[1,768], index: 2, kind: input, shape index: {}]
  %s3 = inlined_call_operand.hbm [shape: f32[8,1], index: 3, kind: input, shape index: {}]
  %s4 = inlined_call_operand.hbm [shape: f32[8,1], index: 4, kind: input, shape index: {}]
  %s5 = inlined_call_operand.hbm [shape: f32[2,8,384], index: 5, kind: output, shape index: {}]
  %s6 = sld [smem:[#allocation0]]
  $region85: #{tpu_custom_call.1} parent=0
    _
  %s8 = ssub.s32 1, %s6
  %s9 = scalar_select 0, %s8, %s6
  $region1: #{tpu_custom_call.1} parent=0
    #allocation4 [shape = 'u8[32768]{0}', space=vmem, size = 0x8000, scoped, tag = 'input window, operand 0, single buffered']
    #allocation5 [shape = 's32[2]{0}', space=sflag, size = 0x8, scoped, tag = 'scoped memory for tpu_custom_call.1']
    #allocation6 [shape = 's32[2]{0}', space=sflag, size = 0x8, scoped, tag = 'scoped memory for tpu_custom_call.1']
    #allocation7 [shape = 'u8[4096]{0}', space=vmem, size = 0x1000, scoped, tag = 'input window, operand 1, single buffered']
    #allocation8 [shape = 's32[1]{0}', space=sflag, size = 0x4, scoped, tag = 'scoped memory for tpu_custom_call.1']
    #allocation9 [shape = 'u8[3072]{0}', space=vmem, size = 0xc00, scoped, tag = 'input window, operand 2, single buffered']
    #allocation10 [shape = 'u8[4096]{0}', space=vmem, size = 0x1000, scoped, tag = 'input window, operand 3, single buffered']
    #allocation11 [shape = 's32[1]{0}', space=sflag, size = 0x4, scoped, tag = 'scoped memory for tpu_custom_call.1']
    #allocation12 [shape = 'u8[4096]{0}', space=vmem, size = 0x1000, scoped, tag = 'input window, operand 4, single buffered']
    #allocation13 [shape = 'u8[49152]{0}', space=vmem, size = 0xc000, scoped, tag = 'output window, operand 0']
    %10 = vsyncpa [#allocation5], 0
    %11 = vsyncpa [#allocation8], 0
    %12 = vsyncpa [#allocation11], 0
    %13 = vsyncpa [#allocation6], 0
    %s14 = scalar_lea.sflag [#allocation6], 1
    %15 = vsyncpa %s14, 0
    loop: start=0, step=1, limit=4
    $region2: #{tpu_custom_call.1} parent=1 // loop_pre_header
      _
    $region3: #{tpu_custom_call.1} parent=1 // loop_header
      %s17 = sphi 0, %s21
      %p18 = scmp.ge.s32.totalorder %s17, 4
      %s24 = sphi 0, %s36
      %s25 = sphi 0, %s32
      %s26 = sphi 0, %s24
      %s27 = sphi 0, %s25
      %s28 = sphi 0, %s26
      %s29 = sphi 0, %s27
      %s39 = sphi 0, %s41
      %s42 = sphi 0, %s39
      %s43 = sphi 0, %s42
      %s59 = sphi 0, %s43
      %s63 = sphi 0, %s63
      %s65 = sphi 0, %s63
      %s66 = sphi 0, %s65
      %s80 = sphi 0, %s66
      %s84 = sphi 0, %s84
      %s86 = sphi 0, %s84
      %s87 = sphi 0, %s86
      %s101 = sphi 0, %s87
      %s105 = sphi 0, %s105
      %s107 = sphi 0, %s105
      %s108 = sphi 0, %s107
      %s122 = sphi 0, %s108
      %s126 = sphi 0, %s126
      %s128 = sphi 0, %s126
      %s129 = sphi 0, %s128
      %s143 = sphi 0, %s129
      %s151 = sphi 0, %s153
      %s154 = sphi 0, %s151
      %s155 = sphi 0, %s154
      %s171 = sphi 0, %s155
    $region4: #{tpu_custom_call.1} parent=1 // loop_header_branch
      %20 = sbr.rel (%p18) target = $region8
    $region5: #{tpu_custom_call.1} parent=1 // loop_body
      %s22 = ssub.s32 %s17, 1
      %s23 = ssub.s32 %s17, 2
      %s30 = sadd.s32 1, %s25
      %p31 = scmp.ge.s32.totalorder %s30, 1
      %s32 = scalar_select %p31, 0, %s30
      %s33 = sadd.s32 1, %s24
      %s34 = scalar_select %p31, %s33, %s24
      %p35 = scmp.ge.s32.totalorder %s34, 2
      %s36 = scalar_select %p35, 0, %s34
      %s37 = ssub.s32 %s25, %s32
      %p38 = scmp.eq.s32.totalorder %s37, 0
      %s40 = sadd.s32 %s39, 1
      %s41 = scalar_select %p38, %s39, %s40
      %p44 = pneg %p38
      %p45 = scmp.eq.s32.totalorder %s17, 1
      %p46 = por %p44, %p45
      %p47 = scmp.ne.s32.totalorder %s39, %s42
      %p48 = scmp.eq.s32.totalorder %s17, 0
      %p49 = por %p47, %p48
      %p50 = scmp.ne.s32.totalorder %s39, %s42
      %p51 = scmp.eq.s32.totalorder %s22, 1
      %p52 = por %p50, %p51
      %p53 = scmp.ne.s32.totalorder %s42, %s43
      %p54 = scmp.eq.s32.totalorder %s22, 0
      %p55 = por %p53, %p54
      %p56 = scmp.ne.s32.totalorder %s42, %s43
      %p57 = scmp.eq.s32.totalorder %s23, 1
      %p58 = por %p56, %p57
      %p60 = scmp.ne.s32.totalorder %s43, %s59
      %p61 = scmp.eq.s32.totalorder %s23, 0
      %p62 = por %p60, %p61
      %s64 = sadd.s32 %s63, 1
      %p67 = scmp.eq.s32.totalorder %s17, 1
      %p68 = scmp.ne.s32.totalorder %s63, %s65
      %p69 = scmp.eq.s32.totalorder %s17, 0
      %p70 = por %p68, %p69
      %p71 = scmp.ne.s32.totalorder %s63, %s65
      %p72 = scmp.eq.s32.totalorder %s22, 1
      %p73 = por %p71, %p72
      %p74 = scmp.ne.s32.totalorder %s65, %s66
      %p75 = scmp.eq.s32.totalorder %s22, 0
      %p76 = por %p74, %p75
      %p77 = scmp.ne.s32.totalorder %s65, %s66
      %p78 = scmp.eq.s32.totalorder %s23, 1
      %p79 = por %p77, %p78
      %p81 = scmp.ne.s32.totalorder %s66, %s80
      %p82 = scmp.eq.s32.totalorder %s23, 0
      %p83 = por %p81, %p82
      %s85 = sadd.s32 %s84, 1
      %p88 = scmp.eq.s32.totalorder %s17, 1
      %p89 = scmp.ne.s32.totalorder %s84, %s86
      %p90 = scmp.eq.s32.totalorder %s17, 0
      %p91 = por %p89, %p90
      %p92 = scmp.ne.s32.totalorder %s84, %s86
      %p93 = scmp.eq.s32.totalorder %s22, 1
      %p94 = por %p92, %p93
      %p95 = scmp.ne.s32.totalorder %s86, %s87
      %p96 = scmp.eq.s32.totalorder %s22, 0
      %p97 = por %p95, %p96
      %p98 = scmp.ne.s32.totalorder %s86, %s87
      %p99 = scmp.eq.s32.totalorder %s23, 1
      %p100 = por %p98, %p99
      %p102 = scmp.ne.s32.totalorder %s87, %s101
      %p103 = scmp.eq.s32.totalorder %s23, 0
      %p104 = por %p102, %p103
      %s106 = sadd.s32 %s105, 1
      %p109 = scmp.eq.s32.totalorder %s17, 1
      %p110 = scmp.ne.s32.totalorder %s105, %s107
      %p111 = scmp.eq.s32.totalorder %s17, 0
      %p112 = por %p110, %p111
      %p113 = scmp.ne.s32.totalorder %s105, %s107
      %p114 = scmp.eq.s32.totalorder %s22, 1
      %p115 = por %p113, %p114
      %p116 = scmp.ne.s32.totalorder %s107, %s108
      %p117 = scmp.eq.s32.totalorder %s22, 0
      %p118 = por %p116, %p117
      %p119 = scmp.ne.s32.totalorder %s107, %s108
      %p120 = scmp.eq.s32.totalorder %s23, 1
      %p121 = por %p119, %p120
      %p123 = scmp.ne.s32.totalorder %s108, %s122
      %p124 = scmp.eq.s32.totalorder %s23, 0
      %p125 = por %p123, %p124
      %s127 = sadd.s32 %s126, 1
      %p130 = scmp.eq.s32.totalorder %s17, 1
      %p131 = scmp.ne.s32.totalorder %s126, %s128
      %p132 = scmp.eq.s32.totalorder %s17, 0
      %p133 = por %p131, %p132
      %p134 = scmp.ne.s32.totalorder %s126, %s128
      %p135 = scmp.eq.s32.totalorder %s22, 1
      %p136 = por %p134, %p135
      %p137 = scmp.ne.s32.totalorder %s128, %s129
      %p138 = scmp.eq.s32.totalorder %s22, 0
      %p139 = por %p137, %p138
      %p140 = scmp.ne.s32.totalorder %s128, %s129
      %p141 = scmp.eq.s32.totalorder %s23, 1
      %p142 = por %p140, %p141
      %p144 = scmp.ne.s32.totalorder %s129, %s143
      %p145 = scmp.eq.s32.totalorder %s23, 0
      %p146 = por %p144, %p145
      %s147 = smul.u32 %s25, %s24
      %s148 = smul.u32 %s32, %s36
      %s149 = ssub.s32 %s147, %s148
      %p150 = scmp.eq.s32.totalorder %s149, 0
      %s152 = sadd.s32 %s151, 1
      %s153 = scalar_select %p150, %s151, %s152
      %p156 = pneg %p150
      %p157 = scmp.eq.s32.totalorder %s17, 1
      %p158 = por %p156, %p157
      %p159 = scmp.ne.s32.totalorder %s151, %s154
      %p160 = scmp.eq.s32.totalorder %s17, 0
      %p161 = por %p159, %p160
      %p162 = scmp.ne.s32.totalorder %s151, %s154
      %p163 = scmp.eq.s32.totalorder %s22, 1
      %p164 = por %p162, %p163
      %p165 = scmp.ne.s32.totalorder %s154, %s155
      %p166 = scmp.eq.s32.totalorder %s22, 0
      %p167 = por %p165, %p166
      %p168 = scmp.ne.s32.totalorder %s154, %s155
      %p169 = scmp.eq.s32.totalorder %s23, 1
      %p170 = por %p168, %p169
      %p172 = scmp.ne.s32.totalorder %s155, %s171
      %p173 = scmp.eq.s32.totalorder %s23, 0
      %p174 = por %p172, %p173
      %p175 = scmp.le.s32.totalorder 1, %s17
      %p176 = scmp.lt.s32.totalorder %s17, 3
      %p177 = pnand %p175, %p176
      %p178 = pneg %p177
      // Predicated region
      $region9: #{tpu_custom_call.1} parent=5 // pred_check
        _
      $region10: #{tpu_custom_call.1} parent=5 // pred_check_branch
        %180 = sbr.rel (%p177) target = $region12
      $region11: #{tpu_custom_call.1} parent=5 // pred_region
        %s181 = ssub.s32 %s17, 1
        // Predicated region
        $region13: #{tpu_custom_call.1} parent=11 // pred_check
          %p182 = pneg %p55
        $region14: #{tpu_custom_call.1} parent=11 // pred_check_branch
          %184 = sbr.rel (%p182) target = $region16
        $region15: #{tpu_custom_call.1} parent=11 // pred_region
          %s185 = smul.u32 2, %s27
          %s187 = ssub.s32 1024, 1024
          %188 = vsyncadd [#allocation5], %s187
          %s189 = smul.addr %s185, 4
          %s190 = smul.addr %s189, 128
          %s191 = scalar_lea.hbm %s0, %s190
          %s192 = sshll.u32 [#allocation4], 4
          %s193 = int_to_ptr.vmem [resolvable:$true] %s192
          %198 = dma.hbm_to_vmem [thread:$0]  %s191, 1024, %s193, [#allocation5], 512, 512, 32
        $region16: #{tpu_custom_call.1} parent=11 // pred_fallthru
          _
        // Predicated region
        $region17: #{tpu_custom_call.1} parent=11 // pred_check
          %p199 = pneg %p76
        $region18: #{tpu_custom_call.1} parent=11 // pred_check_branch
          %201 = sbr.rel (%p199) target = $region20
        $region19: #{tpu_custom_call.1} parent=11 // pred_region
          %s203 = ssub.s32 128, 128
          %204 = vsyncadd [#allocation8], %s203
          %s206 = sshll.u32 [#allocation7], 4
          %s207 = int_to_ptr.vmem [resolvable:$true] %s206
          %209 = dma.hbm_to_vmem [thread:$0]  %s1, 128, %s207, [#allocation8]
        $region20: #{tpu_custom_call.1} parent=11 // pred_fallthru
          _
        // Predicated region
        $region21: #{tpu_custom_call.1} parent=11 // pred_check
          %p210 = pneg %p97
        $region22: #{tpu_custom_call.1} parent=11 // pred_check_branch
          %212 = sbr.rel (%p210) target = $region24
        $region23: #{tpu_custom_call.1} parent=11 // pred_region
          %s214 = ssub.s32 96, 96
          %215 = vsyncadd [#allocation8], %s214
          %s217 = sshll.u32 [#allocation9], 4
          %s218 = int_to_ptr.vmem [resolvable:$true] %s217
          %220 = dma.hbm_to_vmem [thread:$0]  %s2, 96, %s218, [#allocation8]
        $region24: #{tpu_custom_call.1} parent=11 // pred_fallthru
          _
        // Predicated region
        $region25: #{tpu_custom_call.1} parent=11 // pred_check
          %p221 = pneg %p118
        $region26: #{tpu_custom_call.1} parent=11 // pred_check_branch
          %223 = sbr.rel (%p221) target = $region28
        $region27: #{tpu_custom_call.1} parent=11 // pred_region
          %s225 = ssub.s32 128, 128
          %226 = vsyncadd [#allocation11], %s225
          %s228 = sshll.u32 [#allocation10], 4
          %s229 = int_to_ptr.vmem [resolvable:$true] %s228
          %231 = dma.hbm_to_vmem [thread:$0]  %s3, 128, %s229, [#allocation11]
        $region28: #{tpu_custom_call.1} parent=11 // pred_fallthru
          _
        // Predicated region
        $region29: #{tpu_custom_call.1} parent=11 // pred_check
          %p232 = pneg %p139
        $region30: #{tpu_custom_call.1} parent=11 // pred_check_branch
          %234 = sbr.rel (%p232) target = $region32
        $region31: #{tpu_custom_call.1} parent=11 // pred_region
          %s236 = ssub.s32 128, 128
          %237 = vsyncadd [#allocation11], %s236
          %s239 = sshll.u32 [#allocation12], 4
          %s240 = int_to_ptr.vmem [resolvable:$true] %s239
          %242 = dma.hbm_to_vmem [thread:$0]  %s4, 128, %s240, [#allocation11]
        $region32: #{tpu_custom_call.1} parent=11 // pred_fallthru
          _
      $region12: #{tpu_custom_call.1} parent=5 // pred_fallthru
        _
      %p243 = scmp.lt.s32.totalorder %s17, 2
      // Predicated region
      $region33: #{tpu_custom_call.1} parent=5 // pred_check
        %p244 = pneg %p243
      $region34: #{tpu_custom_call.1} parent=5 // pred_check_branch
        %246 = sbr.rel (%p244) target = $region36
      $region35: #{tpu_custom_call.1} parent=5 // pred_region
        _
      $region36: #{tpu_custom_call.1} parent=5 // pred_fallthru
        _
      %p247 = scmp.le.s32.totalorder 1, %s17
      %p248 = scmp.lt.s32.totalorder %s17, 3
      %p249 = pnand %p247, %p248
      %p250 = pneg %p249
      // Predicated region
      $region37: #{tpu_custom_call.1} parent=5 // pred_check
        _
      $region38: #{tpu_custom_call.1} parent=5 // pred_check_branch
        %252 = sbr.rel (%p249) target = $region40
      $region39: #{tpu_custom_call.1} parent=5 // pred_region
        %s253 = ssub.s32 %s17, 1
        // Predicated region
        $region41: #{tpu_custom_call.1} parent=39 // pred_check
          %p254 = pneg %p55
        $region42: #{tpu_custom_call.1} parent=39 // pred_check_branch
          %256 = sbr.rel (%p254) target = $region44
        $region43: #{tpu_custom_call.1} parent=39 // pred_region
          %257 = dma.done [#allocation5], 1024
        $region44: #{tpu_custom_call.1} parent=39 // pred_fallthru
          _
        // Predicated region
        $region45: #{tpu_custom_call.1} parent=39 // pred_check
          %p258 = pneg %p76
        $region46: #{tpu_custom_call.1} parent=39 // pred_check_branch
          %260 = sbr.rel (%p258) target = $region48
        $region47: #{tpu_custom_call.1} parent=39 // pred_region
          %261 = dma.done [#allocation8], 128
        $region48: #{tpu_custom_call.1} parent=39 // pred_fallthru
          _
        // Predicated region
        $region49: #{tpu_custom_call.1} parent=39 // pred_check
          %p262 = pneg %p97
        $region50: #{tpu_custom_call.1} parent=39 // pred_check_branch
          %264 = sbr.rel (%p262) target = $region52
        $region51: #{tpu_custom_call.1} parent=39 // pred_region
          %265 = dma.done [#allocation8], 96
        $region52: #{tpu_custom_call.1} parent=39 // pred_fallthru
          _
        // Predicated region
        $region53: #{tpu_custom_call.1} parent=39 // pred_check
          %p266 = pneg %p118
        $region54: #{tpu_custom_call.1} parent=39 // pred_check_branch
          %268 = sbr.rel (%p266) target = $region56
        $region55: #{tpu_custom_call.1} parent=39 // pred_region
          %269 = dma.done [#allocation11], 128
        $region56: #{tpu_custom_call.1} parent=39 // pred_fallthru
          _
        // Predicated region
        $region57: #{tpu_custom_call.1} parent=39 // pred_check
          %p270 = pneg %p139
        $region58: #{tpu_custom_call.1} parent=39 // pred_check_branch
          %272 = sbr.rel (%p270) target = $region60
        $region59: #{tpu_custom_call.1} parent=39 // pred_region
          %273 = dma.done [#allocation11], 128
        $region60: #{tpu_custom_call.1} parent=39 // pred_fallthru
          _
        %p274 = pneg %p55
        %p275 = pneg %p52
        %p276 = pneg %p76
        %p277 = pneg %p73
        %p278 = pneg %p97
        %p279 = pneg %p94
        %p280 = pneg %p118
        %p281 = pneg %p115
        %p282 = pneg %p139
        %p283 = pneg %p136
        %p284 = pneg %p167
        %p285 = pneg %p164
        %s286 = sand.u32 %s154, 1
        %s287 = scalar_lea.sflag [#allocation6], %s286
        %s288 = sand.u32 %s154, 1
        %s289 = smul.addr %s288, 48
        %s290 = scalar_lea.vmem [#allocation13], %s289
        %s291 = smul.u32 2, %s27
        %s292 = smul.u32 %s27, %s26
        %s293 = smul.u32 2, %s292
        %p294 = scmp.eq.s32.totalorder %s26, 0
        %p295 = scmp.eq.s32.totalorder %s27, 0
        %p296 = pnand %p294, %p295
        %p297 = pneg %p296
        // Predicated region
        $region61: #{tpu_custom_call.1} parent=39 // pred_check
          _
        $region62: #{tpu_custom_call.1} parent=39 // pred_check_branch
          %299 = sbr.rel (%p296) target = $region64
        $region63: #{tpu_custom_call.1} parent=39 // pred_region
          %vm300 = vcmask 7168
          %301 = vst.msk [vmem:[#allocation2] sm:$0xff] %vm300, 0.0
          %302 = vst.msk [vmem:[#allocation3] sm:$0xff] %vm300, 0.0
        $region64: #{tpu_custom_call.1} parent=39 // pred_fallthru
          _
        %v303 = vld [vmem:[#allocation4] sm:$0xff]
        %v304 = vld [vmem:[#allocation4 + $0x8] sm:$0xff]
        %v305 = vld [vmem:[#allocation4 + $0x10] sm:$0xff]
        %v306 = vld [vmem:[#allocation4 + $0x18] sm:$0xff]
        %311 = vrot.lane.b32.xlu0 %v303, 127
        %v312 = vpop.permute.xlu0 %311
        %313 = vrot.lane.b32.xlu0 %v304, 127
        %v314 = vpop.permute.xlu0 %313
        %315 = vrot.lane.b32.xlu0 %v305, 127
        %v316 = vpop.permute.xlu0 %315
        %317 = vrot.lane.b32.xlu0 %v306, 127
        %v318 = vpop.permute.xlu0 %317
        %vm319 = vcmask 1039360
        %v320 = vsel %vm319, %v312, %v314
        %v321 = vsel %vm319, %v314, %v316
        %v322 = vsel %vm319, %v316, %v318
        %326 = vrot.lane.b32.xlu0 %v303, 126
        %v327 = vpop.permute.xlu0 %326
        %328 = vrot.lane.b32.xlu0 %v304, 126
        %v329 = vpop.permute.xlu0 %328
        %330 = vrot.lane.b32.xlu0 %v305, 126
        %v331 = vpop.permute.xlu0 %330
        %332 = vrot.lane.b32.xlu0 %v306, 126
        %v333 = vpop.permute.xlu0 %332
        %vm334 = vcmask 1031168
        %v335 = vsel %vm334, %v327, %v329
        %v336 = vsel %vm334, %v329, %v331
        %v337 = vsel %vm334, %v331, %v333
        %341 = vrot.lane.b32.xlu0 %v303, 110
        %v342 = vpop.permute.xlu0 %341
        %343 = vrot.lane.b32.xlu0 %v304, 110
        %v344 = vpop.permute.xlu0 %343
        %345 = vrot.lane.b32.xlu0 %v305, 110
        %v346 = vpop.permute.xlu0 %345
        %347 = vrot.lane.b32.xlu0 %v306, 110
        %v348 = vpop.permute.xlu0 %347
        %vm349 = vcmask 900096
        %v350 = vsel %vm349, %v342, %v344
        %v351 = vsel %vm349, %v344, %v346
        %v352 = vsel %vm349, %v346, %v348
        %356 = vrot.lane.b32.xlu0 %v303, 109
        %v357 = vpop.permute.xlu0 %356
        %358 = vrot.lane.b32.xlu0 %v304, 109
        %v359 = vpop.permute.xlu0 %358
        %360 = vrot.lane.b32.xlu0 %v305, 109
        %v361 = vpop.permute.xlu0 %360
        %362 = vrot.lane.b32.xlu0 %v306, 109
        %v363 = vpop.permute.xlu0 %362
        %vm364 = vcmask 891904
        %v365 = vsel %vm364, %v357, %v359
        %v366 = vsel %vm364, %v359, %v361
        %v367 = vsel %vm364, %v361, %v363
        %371 = vrot.lane.b32.xlu0 %v303, 108
        %v372 = vpop.permute.xlu0 %371
        %373 = vrot.lane.b32.xlu0 %v304, 108
        %v374 = vpop.permute.xlu0 %373
        %375 = vrot.lane.b32.xlu0 %v305, 108
        %v376 = vpop.permute.xlu0 %375
        %377 = vrot.lane.b32.xlu0 %v306, 108
        %v378 = vpop.permute.xlu0 %377
        %vm379 = vcmask 883712
        %v380 = vsel %vm379, %v372, %v374
        %v381 = vsel %vm379, %v374, %v376
        %v382 = vsel %vm379, %v376, %v378
        %386 = vrot.lane.b32.xlu0 %v303, 92
        %v387 = vpop.permute.xlu0 %386
        %388 = vrot.lane.b32.xlu0 %v304, 92
        %v389 = vpop.permute.xlu0 %388
        %390 = vrot.lane.b32.xlu0 %v305, 92
        %v391 = vpop.permute.xlu0 %390
        %392 = vrot.lane.b32.xlu0 %v306, 92
        %v393 = vpop.permute.xlu0 %392
        %vm394 = vcmask 752640
        %v395 = vsel %vm394, %v387, %v389
        %v396 = vsel %vm394, %v389, %v391
        %v397 = vsel %vm394, %v391, %v393
        %401 = vrot.lane.b32.xlu0 %v303, 91
        %v402 = vpop.permute.xlu0 %401
        %403 = vrot.lane.b32.xlu0 %v304, 91
        %v404 = vpop.permute.xlu0 %403
        %405 = vrot.lane.b32.xlu0 %v305, 91
        %v406 = vpop.permute.xlu0 %405
        %407 = vrot.lane.b32.xlu0 %v306, 91
        %v408 = vpop.permute.xlu0 %407
        %vm409 = vcmask 744448
        %v410 = vsel %vm409, %v402, %v404
        %v411 = vsel %vm409, %v404, %v406
        %v412 = vsel %vm409, %v406, %v408
        %416 = vrot.lane.b32.xlu0 %v303, 90
        %v417 = vpop.permute.xlu0 %416
        %418 = vrot.lane.b32.xlu0 %v304, 90
        %v419 = vpop.permute.xlu0 %418
        %420 = vrot.lane.b32.xlu0 %v305, 90
        %v421 = vpop.permute.xlu0 %420
        %422 = vrot.lane.b32.xlu0 %v306, 90
        %v423 = vpop.permute.xlu0 %422
        %vm424 = vcmask 736256
        %v425 = vsel %vm424, %v417, %v419
        %v426 = vsel %vm424, %v419, %v421
        %v427 = vsel %vm424, %v421, %v423
        %s431 = scalar_lea.vmem [#allocation4], 32
        %v432 = vld [vmem:[%s431] sm:$0xff]
        %v433 = vld [vmem:[%s431 + $0x8] sm:$0xff]
        %v434 = vld [vmem:[%s431 + $0x10] sm:$0xff]
        %v435 = vld [vmem:[%s431 + $0x18] sm:$0xff]
        %440 = vrot.lane.b32.xlu0 %v432, 127
        %v441 = vpop.permute.xlu0 %440
        %442 = vrot.lane.b32.xlu0 %v433, 127
        %v443 = vpop.permute.xlu0 %442
        %444 = vrot.lane.b32.xlu0 %v434, 127
        %v445 = vpop.permute.xlu0 %444
        %446 = vrot.lane.b32.xlu0 %v435, 127
        %v447 = vpop.permute.xlu0 %446
        %v448 = vsel %vm319, %v441, %v443
        %v449 = vsel %vm319, %v443, %v445
        %v450 = vsel %vm319, %v445, %v447
        %454 = vrot.lane.b32.xlu0 %v432, 126
        %v455 = vpop.permute.xlu0 %454
        %456 = vrot.lane.b32.xlu0 %v433, 126
        %v457 = vpop.permute.xlu0 %456
        %458 = vrot.lane.b32.xlu0 %v434, 126
        %v459 = vpop.permute.xlu0 %458
        %460 = vrot.lane.b32.xlu0 %v435, 126
        %v461 = vpop.permute.xlu0 %460
        %v462 = vsel %vm334, %v455, %v457
        %v463 = vsel %vm334, %v457, %v459
        %v464 = vsel %vm334, %v459, %v461
        %468 = vrot.lane.b32.xlu0 %v432, 110
        %v469 = vpop.permute.xlu0 %468
        %470 = vrot.lane.b32.xlu0 %v433, 110
        %v471 = vpop.permute.xlu0 %470
        %472 = vrot.lane.b32.xlu0 %v434, 110
        %v473 = vpop.permute.xlu0 %472
        %474 = vrot.lane.b32.xlu0 %v435, 110
        %v475 = vpop.permute.xlu0 %474
        %v476 = vsel %vm349, %v469, %v471
        %v477 = vsel %vm349, %v471, %v473
        %v478 = vsel %vm349, %v473, %v475
        %482 = vrot.lane.b32.xlu0 %v432, 109
        %v483 = vpop.permute.xlu0 %482
        %484 = vrot.lane.b32.xlu0 %v433, 109
        %v485 = vpop.permute.xlu0 %484
        %486 = vrot.lane.b32.xlu0 %v434, 109
        %v487 = vpop.permute.xlu0 %486
        %488 = vrot.lane.b32.xlu0 %v435, 109
        %v489 = vpop.permute.xlu0 %488
        %v490 = vsel %vm364, %v483, %v485
        %v491 = vsel %vm364, %v485, %v487
        %v492 = vsel %vm364, %v487, %v489
        %496 = vrot.lane.b32.xlu0 %v432, 108
        %v497 = vpop.permute.xlu0 %496
        %498 = vrot.lane.b32.xlu0 %v433, 108
        %v499 = vpop.permute.xlu0 %498
        %500 = vrot.lane.b32.xlu0 %v434, 108
        %v501 = vpop.permute.xlu0 %500
        %502 = vrot.lane.b32.xlu0 %v435, 108
        %v503 = vpop.permute.xlu0 %502
        %v504 = vsel %vm379, %v497, %v499
        %v505 = vsel %vm379, %v499, %v501
        %v506 = vsel %vm379, %v501, %v503
        %510 = vrot.lane.b32.xlu0 %v432, 92
        %v511 = vpop.permute.xlu0 %510
        %512 = vrot.lane.b32.xlu0 %v433, 92
        %v513 = vpop.permute.xlu0 %512
        %514 = vrot.lane.b32.xlu0 %v434, 92
        %v515 = vpop.permute.xlu0 %514
        %516 = vrot.lane.b32.xlu0 %v435, 92
        %v517 = vpop.permute.xlu0 %516
        %v518 = vsel %vm394, %v511, %v513
        %v519 = vsel %vm394, %v513, %v515
        %v520 = vsel %vm394, %v515, %v517
        %524 = vrot.lane.b32.xlu0 %v432, 91
        %v525 = vpop.permute.xlu0 %524
        %526 = vrot.lane.b32.xlu0 %v433, 91
        %v527 = vpop.permute.xlu0 %526
        %528 = vrot.lane.b32.xlu0 %v434, 91
        %v529 = vpop.permute.xlu0 %528
        %530 = vrot.lane.b32.xlu0 %v435, 91
        %v531 = vpop.permute.xlu0 %530
        %v532 = vsel %vm409, %v525, %v527
        %v533 = vsel %vm409, %v527, %v529
        %v534 = vsel %vm409, %v529, %v531
        %538 = vrot.lane.b32.xlu0 %v432, 90
        %v539 = vpop.permute.xlu0 %538
        %540 = vrot.lane.b32.xlu0 %v433, 90
        %v541 = vpop.permute.xlu0 %540
        %542 = vrot.lane.b32.xlu0 %v434, 90
        %v543 = vpop.permute.xlu0 %542
        %544 = vrot.lane.b32.xlu0 %v435, 90
        %v545 = vpop.permute.xlu0 %544
        %v546 = vsel %vm424, %v539, %v541
        %v547 = vsel %vm424, %v541, %v543
        %v548 = vsel %vm424, %v543, %v545
        %v552 = vld [vmem:[#allocation7] sm:$0xff]
        %vm553 = vcmask 588800
        %v555 = vsel %vm553, %v552, 0
        %557 = vmatprep.subr.mxu0 %v304
        %558 = vmatpush1.msra.mxu0 %v303
        %559 = vmatprep.subr.mxu0 %v321
        %560 = vmatpush1.msra.mxu0 %v320
        %561 = vmatprep.subr.mxu0 %v336
        %562 = vmatpush1.msra.mxu0 %v335
        %563 = vmatprep.subr.mxu0 %v351
        %564 = vmatpush1.msra.mxu0 %v350
        %565 = vmatprep.subr.mxu0 %v366
        %566 = vmatpush1.msra.mxu0 %v365
        %567 = vmatprep.subr.mxu0 %v381
        %568 = vmatpush1.msra.mxu0 %v380
        %569 = vmatprep.subr.mxu0 %v396
        %570 = vmatpush1.msra.mxu0 %v395
        %571 = vmatprep.subr.mxu0 %v411
        %572 = vmatpush1.msra.mxu0 %v410
        %573 = vmatprep.subr.mxu0 %v426
        %574 = vmatpush1.msra.mxu0 %v425
        %575 = vmatprep.subr.mxu0 0.0
        %576 = vmatpush1.msra.mxu0 0.0
        %577 = vmatprep.subr.mxu0 0.0
        %578 = vmatpush1.msra.mxu0 0.0
        %579 = vmatprep.subr.mxu0 0.0
        %580 = vmatpush1.msra.mxu0 0.0
        %581 = vmatprep.subr.mxu0 0.0
        %582 = vmatpush1.msra.mxu0 0.0
        %583 = vmatprep.subr.mxu0 0.0
        %584 = vmatpush1.msra.mxu0 0.0
        %585 = vmatprep.subr.mxu0 0.0
        %586 = vmatpush1.msra.mxu0 0.0
        %587 = vmatprep.subr.mxu0 0.0
        %588 = vmatpush1.msra.mxu0 0.0
        %589 = vmatprep.subr.mxu0 0.0
        %590 = vmatpush1.msra.mxu0 0.0
        %591 = vmatprep.subr.mxu0 0.0
        %592 = vmatpush1.msra.mxu0 0.0
        %593 = vmatprep.subr.mxu0 0.0
        %594 = vmatpush1.msra.mxu0 0.0
        %595 = vmatprep.subr.mxu0 0.0
        %596 = vmatpush1.msra.mxu0 0.0
        %597 = vmatprep.subr.mxu0 0.0
        %598 = vmatpush1.msra.mxu0 0.0
        %599 = vmatprep.subr.mxu0 0.0
        %600 = vmatpush1.msra.mxu0 0.0
        %601 = vmatprep.subr.mxu0 0.0
        %602 = vmatpush1.msra.mxu0 0.0
        %603 = vmatprep.subr.mxu0 0.0
        %604 = vmatpush1.msra.mxu0 0.0
        %605 = vmatprep.subr.mxu0 0.0
        %606 = vmatpush1.msra.mxu0 0.0
        %607 = vmatprep.subr.mxu0 0.0
        %608 = vmatpush1.msra.mxu0 0.0
        %609 = vmatprep.subr.mxu0 0.0
        %610 = vmatpush1.msra.mxu0 0.0
        %611 = vmatprep.subr.mxu0 0.0
        %612 = vmatpush1.msra.mxu0 0.0
        %613 = vmatprep.subr.mxu0 0.0
        %614 = vmatpush1.msra.mxu0 0.0
        %615 = vmatprep.subr.mxu0 0.0
        %616 = vmatpush1.msra.mxu0 0.0
        %617 = vmatprep.subr.mxu0 0.0
        %618 = vmatpush1.msra.mxu0 0.0
        %619 = vmatprep.subr.mxu0 0.0
        %620 = vmatpush1.msra.mxu0 0.0
        %621 = vmatprep.mubr.f32.mxu0 0.0
        %622 = vmatmul.mubr.f32.gmra.mrb[0].mxu0 %v555
        %v623 = vpop.f32.mrb[0].mxu0
        %v624 = vadd.f32 0.0, %v623
        %v625 = vpop.f32.mrb[0].mxu0
        %v626 = vadd.f32 0.0, %v625
        %627 = vdwg.mxu0
        %628 = vmatprep.subr.mxu0 %v432
        %629 = vmatpush1.msra.mxu0 %v305
        %630 = vmatprep.subr.mxu0 %v448
        %631 = vmatpush1.msra.mxu0 %v322
        %632 = vmatprep.subr.mxu0 %v462
        %633 = vmatpush1.msra.mxu0 %v337
        %634 = vmatprep.subr.mxu0 %v476
        %635 = vmatpush1.msra.mxu0 %v352
        %636 = vmatprep.subr.mxu0 %v490
        %637 = vmatpush1.msra.mxu0 %v367
        %638 = vmatprep.subr.mxu0 %v504
        %639 = vmatpush1.msra.mxu0 %v382
        %640 = vmatprep.subr.mxu0 %v518
        %641 = vmatpush1.msra.mxu0 %v397
        %642 = vmatprep.subr.mxu0 %v532
        %643 = vmatpush1.msra.mxu0 %v412
        %644 = vmatprep.subr.mxu0 %v546
        %645 = vmatpush1.msra.mxu0 %v427
        %646 = vmatprep.subr.mxu0 0.0
        %647 = vmatpush1.msra.mxu0 0.0
        %648 = vmatprep.subr.mxu0 0.0
        %649 = vmatpush1.msra.mxu0 0.0
        %650 = vmatprep.subr.mxu0 0.0
        %651 = vmatpush1.msra.mxu0 0.0
        %652 = vmatprep.subr.mxu0 0.0
        %653 = vmatpush1.msra.mxu0 0.0
        %654 = vmatprep.subr.mxu0 0.0
        %655 = vmatpush1.msra.mxu0 0.0
        %656 = vmatprep.subr.mxu0 0.0
        %657 = vmatpush1.msra.mxu0 0.0
        %658 = vmatprep.subr.mxu0 0.0
        %659 = vmatpush1.msra.mxu0 0.0
        %660 = vmatprep.subr.mxu0 0.0
        %661 = vmatpush1.msra.mxu0 0.0
        %662 = vmatprep.subr.mxu0 0.0
        %663 = vmatpush1.msra.mxu0 0.0
        %664 = vmatprep.subr.mxu0 0.0
        %665 = vmatpush1.msra.mxu0 0.0
        %666 = vmatprep.subr.mxu0 0.0
        %667 = vmatpush1.msra.mxu0 0.0
        %668 = vmatprep.subr.mxu0 0.0
        %669 = vmatpush1.msra.mxu0 0.0
        %670 = vmatprep.subr.mxu0 0.0
        %671 = vmatpush1.msra.mxu0 0.0
        %672 = vmatprep.subr.mxu0 0.0
        %673 = vmatpush1.msra.mxu0 0.0
        %674 = vmatprep.subr.mxu0 0.0
        %675 = vmatpush1.msra.mxu0 0.0
        %676 = vmatprep.subr.mxu0 0.0
        %677 = vmatpush1.msra.mxu0 0.0
        %678 = vmatprep.subr.mxu0 0.0
        %679 = vmatpush1.msra.mxu0 0.0
        %680 = vmatprep.subr.mxu0 0.0
        %681 = vmatpush1.msra.mxu0 0.0
        %682 = vmatprep.subr.mxu0 0.0
        %683 = vmatpush1.msra.mxu0 0.0
        %684 = vmatprep.subr.mxu0 0.0
        %685 = vmatpush1.msra.mxu0 0.0
        %686 = vmatprep.subr.mxu0 0.0
        %687 = vmatpush1.msra.mxu0 0.0
        %688 = vmatprep.subr.mxu0 0.0
        %689 = vmatpush1.msra.mxu0 0.0
        %690 = vmatprep.subr.mxu0 0.0
        %691 = vmatpush1.msra.mxu0 0.0
        %692 = vmatprep.mubr.f32.mxu0 0.0
        %693 = vmatmul.mubr.f32.gmra.mrb[0].mxu0 %v555
        %v694 = vpop.f32.mrb[0].mxu0
        %v695 = vadd.f32 0.0, %v694
        %v696 = vpop.f32.mrb[0].mxu0
        %v697 = vadd.f32 0.0, %v696
        %698 = vdwg.mxu0
        %699 = vmatprep.subr.mxu0 %v434
        %700 = vmatpush1.msra.mxu0 %v433
        %701 = vmatprep.subr.mxu0 %v450
        %702 = vmatpush1.msra.mxu0 %v449
        %703 = vmatprep.subr.mxu0 %v464
        %704 = vmatpush1.msra.mxu0 %v463
        %705 = vmatprep.subr.mxu0 %v478
        %706 = vmatpush1.msra.mxu0 %v477
        %707 = vmatprep.subr.mxu0 %v492
        %708 = vmatpush1.msra.mxu0 %v491
        %709 = vmatprep.subr.mxu0 %v506
        %710 = vmatpush1.msra.mxu0 %v505
        %711 = vmatprep.subr.mxu0 %v520
        %712 = vmatpush1.msra.mxu0 %v519
        %713 = vmatprep.subr.mxu0 %v534
        %714 = vmatpush1.msra.mxu0 %v533
        %715 = vmatprep.subr.mxu0 %v548
        %716 = vmatpush1.msra.mxu0 %v547
        %717 = vmatprep.subr.mxu0 0.0
        %718 = vmatpush1.msra.mxu0 0.0
        %719 = vmatprep.subr.mxu0 0.0
        %720 = vmatpush1.msra.mxu0 0.0
        %721 = vmatprep.subr.mxu0 0.0
        %722 = vmatpush1.msra.mxu0 0.0
        %723 = vmatprep.subr.mxu0 0.0
        %724 = vmatpush1.msra.mxu0 0.0
        %725 = vmatprep.subr.mxu0 0.0
        %726 = vmatpush1.msra.mxu0 0.0
        %727 = vmatprep.subr.mxu0 0.0
        %728 = vmatpush1.msra.mxu0 0.0
        %729 = vmatprep.subr.mxu0 0.0
        %730 = vmatpush1.msra.mxu0 0.0
        %731 = vmatprep.subr.mxu0 0.0
        %732 = vmatpush1.msra.mxu0 0.0
        %733 = vmatprep.subr.mxu0 0.0
        %734 = vmatpush1.msra.mxu0 0.0
        %735 = vmatprep.subr.mxu0 0.0
        %736 = vmatpush1.msra.mxu0 0.0
        %737 = vmatprep.subr.mxu0 0.0
        %738 = vmatpush1.msra.mxu0 0.0
        %739 = vmatprep.subr.mxu0 0.0
        %740 = vmatpush1.msra.mxu0 0.0
        %741 = vmatprep.subr.mxu0 0.0
        %742 = vmatpush1.msra.mxu0 0.0
        %743 = vmatprep.subr.mxu0 0.0
        %744 = vmatpush1.msra.mxu0 0.0
        %745 = vmatprep.subr.mxu0 0.0
        %746 = vmatpush1.msra.mxu0 0.0
        %747 = vmatprep.subr.mxu0 0.0
        %748 = vmatpush1.msra.mxu0 0.0
        %749 = vmatprep.subr.mxu0 0.0
        %750 = vmatpush1.msra.mxu0 0.0
        %751 = vmatprep.subr.mxu0 0.0
        %752 = vmatpush1.msra.mxu0 0.0
        %753 = vmatprep.subr.mxu0 0.0
        %754 = vmatpush1.msra.mxu0 0.0
        %755 = vmatprep.subr.mxu0 0.0
        %756 = vmatpush1.msra.mxu0 0.0
        %757 = vmatprep.subr.mxu0 0.0
        %758 = vmatpush1.msra.mxu0 0.0
        %759 = vmatprep.subr.mxu0 0.0
        %760 = vmatpush1.msra.mxu0 0.0
        %761 = vmatprep.subr.mxu0 0.0
        %762 = vmatpush1.msra.mxu0 0.0
        %763 = vmatprep.mubr.f32.mxu0 0.0
        %764 = vmatmul.mubr.f32.gmra.mrb[0].mxu0 %v555
        %v765 = vpop.f32.mrb[0].mxu0
        %v766 = vadd.f32 0.0, %v765
        %v767 = vpop.f32.mrb[0].mxu0
        %v768 = vadd.f32 0.0, %v767
        %769 = vdwg.mxu0
        // Predicated region
        $region65: #{tpu_custom_call.1} parent=39 // pred_check
          %p770 = pneg %p294
        $region66: #{tpu_custom_call.1} parent=39 // pred_check_branch
          %772 = sbr.rel (%p770) target = $region68
        $region67: #{tpu_custom_call.1} parent=39 // pred_region
          %v773 = vld [vmem:[#allocation9] sm:$0x3f]
          %v775 = vlaneseq
          %v776 = vshrl.u32 %v775, 7
          %v777 = vsub.s32 0, %v776
          %v778 = vrot.slane %v773, %v777
          %v779 = vlaneseq
          %v780 = vshrl.u32 %v779, 7
          %v781 = vsub.s32 1, %v780
          %v782 = vrot.slane %v773, %v781
          %v783 = vlaneseq
          %v784 = vshrl.u32 %v783, 7
          %v785 = vsub.s32 2, %v784
          %v786 = vrot.slane %v773, %v785
          %v787 = vlaneseq
          %v788 = vshrl.u32 %v787, 7
          %v789 = vsub.s32 3, %v788
          %v790 = vrot.slane %v773, %v789
          %v791 = vlaneseq
          %v792 = vshrl.u32 %v791, 7
          %v793 = vsub.s32 4, %v792
          %v794 = vrot.slane %v773, %v793
          %v795 = vlaneseq
          %v796 = vshrl.u32 %v795, 7
          %v797 = vsub.s32 5, %v796
          %v798 = vrot.slane %v773, %v797
          %v805 = vmul.f32 %v624, %v778
          %v806 = vmul.f32 %v626, %v782
          %v807 = vmul.f32 %v695, %v786
          %v808 = vmul.f32 %v697, %v790
          %v809 = vmul.f32 %v766, %v794
          %v810 = vmul.f32 %v768, %v798
          %v811 = vld [vmem:[#allocation2] sm:$0xff]
          %v812 = vadd.f32 %v805, %v806
          %v813 = vadd.f32 %v812, %v807
          %v814 = vadd.f32 %v813, %v808
          %v815 = vadd.f32 %v814, %v809
          %v816 = vadd.f32 %v815, %v810
          %817 = vadd.xlane.f32.xlu0 %v816
          %v818 = vpop.xlane.xlu0 %817
          %v819 = vadd.f32 %v811, %v818
          %vm820 = vcmask 7168
          %821 = vst.msk [vmem:[#allocation2] sm:$0xff] %vm820, %v819
          %v822 = vld [vmem:[#allocation3] sm:$0xff]
          %v823 = vmul.f32 %v805, %v624
          %v824 = vmul.f32 %v806, %v626
          %v825 = vmul.f32 %v807, %v695
          %v826 = vmul.f32 %v808, %v697
          %v827 = vmul.f32 %v809, %v766
          %v828 = vmul.f32 %v810, %v768
          %v829 = vadd.f32 %v823, %v824
          %v830 = vadd.f32 %v829, %v825
          %v831 = vadd.f32 %v830, %v826
          %v832 = vadd.f32 %v831, %v827
          %v833 = vadd.f32 %v832, %v828
          %834 = vadd.xlane.f32.xlu0 %v833
          %v835 = vpop.xlane.xlu0 %834
          %v836 = vadd.f32 %v822, %v835
          %837 = vst.msk [vmem:[#allocation3] sm:$0xff] %vm820, %v836
        $region68: #{tpu_custom_call.1} parent=39 // pred_fallthru
          _
        %p838 = scmp.eq.s32.totalorder %s26, 1
        // Predicated region
        $region69: #{tpu_custom_call.1} parent=39 // pred_check
          %p839 = pneg %p838
        $region70: #{tpu_custom_call.1} parent=39 // pred_check_branch
          %841 = sbr.rel (%p839) target = $region72
        $region71: #{tpu_custom_call.1} parent=39 // pred_region
          %v842 = vld [vmem:[#allocation2] sm:$0xff]
          %v843 = vmul.f32 %v842, 0.001953125
          %v844 = vld [vmem:[#allocation3] sm:$0xff]
          %v845 = vmul.f32 %v844, 0.001953125
          %v846 = vmul.f32 %v843, %v843
          %v847 = vsub.f32 %v845, %v846
          %v848 = vadd.f32 %v847, 1e-05
          %v849 = vrsqrt.pop %v848
          %v850 = vld [vmem:[#allocation10] sm:$0xff]
          %v851 = vmul.f32 %v850, %v849
          %v852 = vld [vmem:[#allocation12] sm:$0xff]
          %v853 = vmul.f32 %v843, %v851
          %v854 = vsub.f32 %v852, %v853
          %856 = vset.pattern.permute.xlu0 0
          %857 = vperm.xlu0 %856, %v851
          %v858 = vpop.permute.xlu0 %857
          %v860 = vmul.f32 %v624, %v858
          %v861 = vmul.f32 %v626, %v858
          %v862 = vmul.f32 %v695, %v858
          %v863 = vmul.f32 %v697, %v858
          %v864 = vmul.f32 %v766, %v858
          %v865 = vmul.f32 %v768, %v858
          %867 = vset.pattern.permute.xlu0 0
          %868 = vperm.xlu0 %867, %v854
          %v869 = vpop.permute.xlu0 %868
          %v871 = vadd.f32 %v860, %v869
          %v872 = vadd.f32 %v861, %v869
          %v873 = vadd.f32 %v862, %v869
          %v874 = vadd.f32 %v863, %v869
          %v875 = vadd.f32 %v864, %v869
          %v876 = vadd.f32 %v865, %v869
          %877 = vst [vmem:[%s290] sm:$0xff] %v871
          %878 = vst [vmem:[%s290 + $0x8] sm:$0xff] %v872
          %879 = vst [vmem:[%s290 + $0x10] sm:$0xff] %v873
          %s880 = scalar_lea.vmem %s290, 24 [#allocation13]
          %881 = vst [vmem:[%s880] sm:$0xff] %v874
          %882 = vst [vmem:[%s880 + $0x8] sm:$0xff] %v875
          %883 = vst [vmem:[%s880 + $0x10] sm:$0xff] %v876
        $region72: #{tpu_custom_call.1} parent=39 // pred_fallthru
          _
        %s884 = sand.u32 %s154, 1
        %s885 = scalar_lea.sflag [#allocation6], %s884
        %s886 = sand.u32 %s154, 1
        %s887 = smul.addr %s886, 48
        %s888 = scalar_lea.vmem [#allocation13], %s887
        // Predicated region
        $region73: #{tpu_custom_call.1} parent=39 // pred_check
          %p889 = pneg %p164
        $region74: #{tpu_custom_call.1} parent=39 // pred_check_branch
          %891 = sbr.rel (%p889) target = $region76
        $region75: #{tpu_custom_call.1} parent=39 // pred_region
          %s892 = smul.u32 %s27, %s26
          %s893 = smul.u32 2, %s892
          %s895 = ssub.s32 768, 768
          %896 = vsyncadd %s885, %s895
          %s897 = smul.addr %s893, 3
          %s898 = smul.addr %s897, 128
          %s899 = scalar_lea.hbm %s5, %s898
          %s900 = sshll.u32 %s888, 4
          %s901 = int_to_ptr.vmem [resolvable:$true] %s900
          %906 = dma.vmem_to_hbm [thread:$0]  %s901, 768, %s899, %s885, 384, 384, 24
        $region76: #{tpu_custom_call.1} parent=39 // pred_fallthru
          _
      $region40: #{tpu_custom_call.1} parent=5 // pred_fallthru
        _
      %p907 = scmp.le.s32.totalorder 2, %s17
      // Predicated region
      $region77: #{tpu_custom_call.1} parent=5 // pred_check
        %p908 = pneg %p907
      $region78: #{tpu_custom_call.1} parent=5 // pred_check_branch
        %910 = sbr.rel (%p908) target = $region80
      $region79: #{tpu_custom_call.1} parent=5 // pred_region
        %s911 = ssub.s32 %s17, 2
        // Predicated region
        $region81: #{tpu_custom_call.1} parent=79 // pred_check
          %p912 = pneg %p170
        $region82: #{tpu_custom_call.1} parent=79 // pred_check_branch
          %914 = sbr.rel (%p912) target = $region84
        $region83: #{tpu_custom_call.1} parent=79 // pred_region
          %s915 = sand.u32 %s155, 1
          %s916 = scalar_lea.sflag [#allocation6], %s915
          %s917 = sand.u32 %s155, 1
          %s918 = smul.addr %s917, 48
          %s919 = scalar_lea.vmem [#allocation13], %s918
          %920 = dma.done %s916, 768
        $region84: #{tpu_custom_call.1} parent=79 // pred_fallthru
          _
      $region80: #{tpu_custom_call.1} parent=5 // pred_fallthru
        _
    $region6: #{tpu_custom_call.1} parent=1 // loop_footer
      %s21 = sadd.s32 1, %s17
    $region7: #{tpu_custom_call.1} parent=1 // loop_footer_branch
      %16 = sbr.rel target = $region3
    $region8: #{tpu_custom_call.1} parent=1 // loop_exit
      _
    %921 = vsyncpa [#allocation5], 1
    %s922 = scalar_lea.sflag [#allocation5], 1
    %923 = vsyncpa %s922, 1
    %924 = vsyncpa [#allocation8], 1
    %925 = vsyncpa [#allocation11], 1
    %926 = vsyncpa [#allocation6], 1
    %s927 = scalar_lea.sflag [#allocation6], 1
    %928 = vsyncpa %s927, 1

</llo_original>
